<compile_context>
chip_gen: v7x
topology: tpu7x:2x2x1
jax: 0.10.0
libtpu: 0.0.40
codegen_flags: <defaults>
</compile_context>

<pallas_src>
import functools

import jax
import jax.numpy as jnp
from jax.experimental import pallas as pl
from jax.experimental.pallas import tpu as pltpu


def _lseg_fused_kernel(x_ref, wst_ref, bs_ref, wct_ref, bc_ref, o_ref):
    """Fused stem-conv + ReLU + folded (head1 @ normalized-text) projection.

    x_ref   : (1, Cin, TP)        pixel tile, pixels on lanes (native dtype)
    wst_ref : (F, Cin)            stem weight, transposed (bf16)
    bs_ref  : (F, 1)              stem bias (f32)
    wct_ref : (NC, F)             folded head1 x normalized text, transposed (bf16)
    bc_ref  : (NC, 1)             folded bias (f32)
    o_ref   : (1, NC, TP)         per-pixel class logits (out_dtype)
    """
    x = x_ref[0].astype(wst_ref.dtype)                        # cast per-tile in VMEM

    # stem (backbone stand-in): 1x1 conv + bias + ReLU, f32 accumulation
    feat = jnp.dot(wst_ref[...], x, preferred_element_type=jnp.float32)
    feat = jnp.maximum(feat + bs_ref[...], 0.0)               # (F, TP) f32

    # folded head1 + cosine-similarity projection (tiny: F x NC), bf16 operands
    feat = feat.astype(wct_ref.dtype)
    logits = jnp.dot(wct_ref[...], feat,
                     preferred_element_type=jnp.float32)      # (NC, TP)
    o_ref[0] = (logits + bc_ref[...]).astype(o_ref.dtype)


@functools.partial(jax.jit,
                   static_argnames=("tile_p", "compute_dtype", "out_dtype"))
def lseg_optimized_inference(x_nchw, w_stem, b_stem, w_head, b_head,
                             text_vector, tile_p=8192,
                             compute_dtype=jnp.bfloat16,
                             out_dtype=jnp.bfloat16):
    """Fused LSegOptimizedInference forward.

    x_nchw      : [B, Cin, H, W]   (PyTorch NCHW convention)
    w_stem      : [Cin, F]         backbone/refinenet stand-in (1x1 conv)
    b_stem      : [F]
    w_head      : [F, 512]         scratch.head1 weight (1x1 conv)
    b_head      : [512]
    text_vector : [n_classes, 512] OptimizedEmbeddings.text_vector (un-normalized)
    returns     : [B, n_classes, H, W]  (out_dtype)
    """
    B, Cin, H, W = x_nchw.shape
    F = w_stem.shape[1]
    NC = text_vector.shape[0]
    P_hw = H * W

    # ---- fold: normalize text vectors and merge with head1 (exact algebra;
    # the spec's OptimizedEmbeddings normalizes only the text side) ----
    tv32 = text_vector.astype(jnp.float32)
    t_norm = tv32 * jax.lax.rsqrt(
        jnp.sum(tv32 * tv32, axis=-1, keepdims=True))          # [NC, 512]
    w_comb = jnp.dot(w_head.astype(jnp.float32), t_norm.T)     # [F, NC]
    b_comb = jnp.dot(b_head.astype(jnp.float32), t_norm.T)     # [NC]

    # kernel-side operand layouts
    wst = jnp.transpose(w_stem, (1, 0)).astype(compute_dtype)  # [F, Cin]
    bs2 = b_stem.reshape(F, 1).astype(jnp.float32)             # [F, 1]
    wct = jnp.transpose(w_comb, (1, 0)).astype(compute_dtype)  # [NC, F]
    bc2 = b_comb.reshape(NC, 1).astype(jnp.float32)            # [NC, 1]

    # ---- pixels-on-lanes layout: NCHW -> [B, Cin, P] (free reshape, native
    # dtype: no standalone HBM cast pass; cast happens in-kernel per tile) ----
    x_cp = x_nchw.reshape(B, Cin, P_hw)
    in_bytes = x_cp.dtype.itemsize
    out_bytes = jnp.dtype(out_dtype).itemsize
    cmp_bytes = jnp.dtype(compute_dtype).itemsize

    # ---- tile sizing: lane-dense multiples of 128, VMEM-budgeted ----
    tile_p = max(128, (int(tile_p) // 128) * 128)
    tile_p = min(tile_p, pl.cdiv(P_hw, 128) * 128)

    w_bytes = F * Cin * cmp_bytes + F * 4 + NC * F * cmp_bytes + NC * 4
    per_px = (2 * Cin * in_bytes           # double-buffered input tile
              + 2 * NC * out_bytes         # double-buffered output tile
              + Cin * cmp_bytes            # in-kernel cast of x
              + F * 4 + F * cmp_bytes)     # f32 + bf16 feat intermediates
    VMEM_TARGET = 24 << 20                 # fits v7x (64 MiB physical) w/ headroom
    tp_cap = max(128, (VMEM_TARGET - 2 * w_bytes) // per_px)
    tile_p = min(tile_p, max(128, (tp_cap // 128) * 128))

    # v7x megacore: keep >= ~8 grid steps when the problem size allows it
    min_steps = 8
    want_p_steps = pl.cdiv(min_steps, B)
    if pl.cdiv(P_hw, tile_p) < want_p_steps:
        tile_p = max(128, (pl.cdiv(P_hw, want_p_steps) // 128) * 128)

    grid = (B, pl.cdiv(P_hw, tile_p))      # ragged final tile: masked stores

    est_vmem = per_px * tile_p + 2 * w_bytes
    vmem_limit = int(min(48 << 20, max(32 << 20, 2 * est_vmem)))

    cost = pl.CostEstimate(
        flops=2 * B * P_hw * (Cin * F + F * NC),
        transcendentals=0,
        bytes_accessed=(B * Cin * P_hw * in_bytes
                        + B * NC * P_hw * out_bytes + w_bytes))

    out_cp = pl.pallas_call(
        _lseg_fused_kernel,
        out_shape=jax.ShapeDtypeStruct((B, NC, P_hw), out_dtype),
        grid=grid,
        in_specs=[
            pl.BlockSpec((1, Cin, tile_p), lambda b, p: (b, 0, p)),  # pixel tile
            pl.BlockSpec((F, Cin), lambda b, p: (0, 0)),             # stem W^T
            pl.BlockSpec((F, 1), lambda b, p: (0, 0)),               # stem bias
            pl.BlockSpec((NC, F), lambda b, p: (0, 0)),              # folded W^T
            pl.BlockSpec((NC, 1), lambda b, p: (0, 0)),              # folded bias
        ],
        out_specs=pl.BlockSpec((1, NC, tile_p), lambda b, p: (b, 0, p)),
        compiler_params=pltpu.CompilerParams(
            dimension_semantics=("parallel", "parallel"),
            vmem_limit_bytes=vmem_limit),
        cost_estimate=cost,
    )(x_cp, wst, bs2, wct, bc2)

    # [B, NC, P] -> [B, n_classes, H, W] (no slice, no transpose)
    return out_cp.reshape(B, NC, H, W)


def _reference(x_nchw, w_stem, b_stem, w_head, b_head, text_vector):
    """Pure-JAX f32 reference mirroring the PyTorch semantics."""
    B, Cin, H, W = x_nchw.shape
    x = jnp.transpose(x_nchw, (0, 2, 3, 1)).reshape(-1, Cin)          # [P, Cin]
    feat = jnp.maximum(x @ w_stem + b_stem, 0.0)                      # backbone stand-in
    emb = feat @ w_head + b_head                                      # head1 (1x1 conv)
    t = text_vector / jnp.linalg.norm(text_vector, axis=-1, keepdims=True)
    logits = (emb @ t.T).reshape(B, H, W, -1)                         # cosine-sim matmul
    return jnp.transpose(logits, (0, 3, 1, 2))


if __name__ == "__main__":
    # Small shapes consistent with the module:
    #   image x: [B, 3, H, W]; features F; embedding_dim must be 512
    #   (OptimizedEmbeddings hard-codes reshape(-1, 512)).
    B, Cin, H, W = 2, 3, 16, 16
    F = 32                 # "features" (256 in the real model)
    E = 512                # out_c / embedding_dim
    n_classes = 8

    key = jax.random.PRNGKey(0)
    kx, kws, kbs, kwh, kbh, ktv = jax.random.split(key, 6)

    x = jax.random.normal(kx, (B, Cin, H, W), dtype=jnp.float32)
    w_stem = jax.random.normal(kws, (Cin, F), dtype=jnp.float32) * 0.1
    b_stem = jax.random.normal(kbs, (F,), dtype=jnp.float32) * 0.1
    w_head = jax.random.normal(kwh, (F, E), dtype=jnp.float32) * 0.05
    b_head = jax.random.normal(kbh, (E,), dtype=jnp.float32) * 0.05
    text_vector = jax.random.normal(ktv, (n_classes, E), dtype=jnp.float32)

    out = lseg_optimized_inference(x, w_stem, b_stem, w_head, b_head,
                                   text_vector)
    out = jax.block_until_ready(out)

    ref = _reference(x, w_stem, b_stem, w_head, b_head, text_vector)
    assert out.shape == (B, n_classes, H, W), out.shape
    # bf16 compute + bf16 logits -> loosened tolerance vs the f32 reference.
    out32 = out.astype(jnp.float32)
    assert jnp.allclose(out32, ref, atol=3e-2, rtol=3e-2), \
        float(jnp.max(jnp.abs(out32 - ref)))

    print("KERNEL_OK")
</pallas_src>

<mosaic_0001>
module attributes {stable_mosaic.version = 11 : i64} {
  func.func @_lseg_fused_kernel(%arg0: i32, %arg1: i32, %arg2: memref<1x3x128xf32, #tpu.memory_space<vmem>>, %arg3: memref<32x3xbf16, #tpu.memory_space<vmem>>, %arg4: memref<32x1xf32, #tpu.memory_space<vmem>>, %arg5: memref<8x32xbf16, #tpu.memory_space<vmem>>, %arg6: memref<8x1xf32, #tpu.memory_space<vmem>>, %arg7: memref<1x8x128xbf16, #tpu.memory_space<vmem>>) attributes {dimension_semantics = [#tpu.dimension_semantics<parallel>, #tpu.dimension_semantics<parallel>], iteration_bounds = array<i64: 2, 2>, scalar_prefetch = 0 : i64, scratch_operands = 0 : i64, tpu.core_type = #tpu.core_type<tc>, window_params = [{transform_indices = @transform_0, window_bounds = array<i64: 1, 3, 128>}, {pipeline_mode = #tpu.pipeline_mode<synchronous>, transform_indices = @transform_1, window_bounds = array<i64: 32, 3>}, {pipeline_mode = #tpu.pipeline_mode<synchronous>, transform_indices = @transform_2, window_bounds = array<i64: 32, 1>}, {pipeline_mode = #tpu.pipeline_mode<synchronous>, transform_indices = @transform_3, window_bounds = array<i64: 8, 32>}, {pipeline_mode = #tpu.pipeline_mode<synchronous>, transform_indices = @transform_4, window_bounds = array<i64: 8, 1>}, {transform_indices = @transform_5, window_bounds = array<i64: 1, 8, 128>}]} {
    %c0 = arith.constant 0 : index
    %c0_0 = arith.constant 0 : index
    %c0_1 = arith.constant 0 : index
    %0 = vector.load %arg2[%c0, %c0_0, %c0_1] : memref<1x3x128xf32, #tpu.memory_space<vmem>>, vector<1x3x128xf32>
    %1 = vector.shape_cast %0 : vector<1x3x128xf32> to vector<3x128xf32>
    %2 = arith.truncf %1 : vector<3x128xf32> to vector<3x128xbf16>
    %c0_2 = arith.constant 0 : index
    %c0_3 = arith.constant 0 : index
    %3 = vector.load %arg3[%c0_2, %c0_3] : memref<32x3xbf16, #tpu.memory_space<vmem>>, vector<32x3xbf16>
    %cst = arith.constant dense<0.000000e+00> : vector<32x128xf32>
    %4 = tpu.matmul %3, %2, %cst {dimension_numbers = #tpu.dot_dimension_numbers<[1], [0], [0], [1], [0, 0, 1, 1], [], []>} : vector<32x3xbf16>, vector<3x128xbf16>, vector<32x128xf32> -> vector<32x128xf32>
    %c0_4 = arith.constant 0 : index
    %c0_5 = arith.constant 0 : index
    %5 = vector.load %arg4[%c0_4, %c0_5] : memref<32x1xf32, #tpu.memory_space<vmem>>, vector<32x1xf32>
    %6 = vector.broadcast %5 : vector<32x1xf32> to vector<32x128xf32>
    %7 = arith.addf %4, %6 : vector<32x128xf32>
    %cst_6 = arith.constant 0.000000e+00 : f32
    %8 = vector.broadcast %cst_6 : f32 to vector<32x128xf32>
    %9 = arith.maximumf %7, %8 : vector<32x128xf32>
    %10 = arith.truncf %9 : vector<32x128xf32> to vector<32x128xbf16>
    %c0_7 = arith.constant 0 : index
    %c0_8 = arith.constant 0 : index
    %11 = vector.load %arg5[%c0_7, %c0_8] : memref<8x32xbf16, #tpu.memory_space<vmem>>, vector<8x32xbf16>
    %cst_9 = arith.constant dense<0.000000e+00> : vector<8x128xf32>
    %12 = tpu.matmul %11, %10, %cst_9 {dimension_numbers = #tpu.dot_dimension_numbers<[1], [0], [0], [1], [0, 0, 1, 1], [], []>} : vector<8x32xbf16>, vector<32x128xbf16>, vector<8x128xf32> -> vector<8x128xf32>
    %c0_10 = arith.constant 0 : index
    %c0_11 = arith.constant 0 : index
    %13 = vector.load %arg6[%c0_10, %c0_11] : memref<8x1xf32, #tpu.memory_space<vmem>>, vector<8x1xf32>
    %14 = vector.broadcast %13 : vector<8x1xf32> to vector<8x128xf32>
    %15 = arith.addf %12, %14 : vector<8x128xf32>
    %16 = arith.truncf %15 : vector<8x128xf32> to vector<8x128xbf16>
    %c0_12 = arith.constant 0 : index
    %c0_13 = arith.constant 0 : index
    %c0_14 = arith.constant 0 : index
    %17 = vector.load %arg7[%c0_12, %c0_13, %c0_14] : memref<1x8x128xbf16, #tpu.memory_space<vmem>>, vector<1x8x128xbf16>
    %18 = vector.shape_cast %17 : vector<1x8x128xbf16> to vector<8x128xbf16>
    %19 = vector.shape_cast %16 : vector<8x128xbf16> to vector<1x8x128xbf16>
    tpu.vector_store %arg7[%c0_12, %c0_13, %c0_14], %19 {strides = array<i32>} : memref<1x8x128xbf16, #tpu.memory_space<vmem>>, vector<1x8x128xbf16>,
    return
  }
  func.func @transform_0(%arg0: i32, %arg1: i32) -> (i32, i32, i32) {
    %c0_i32 = arith.constant 0 : i32
    %c0_i32_0 = arith.constant 0 : i32
    return %arg0, %c0_i32, %arg1 : i32, i32, i32
  }
  func.func @transform_1(%arg0: i32, %arg1: i32) -> (i32, i32) {
    %c0_i32 = arith.constant 0 : i32
    %c0_i32_0 = arith.constant 0 : i32
    %c0_i32_1 = arith.constant 0 : i32
    return %c0_i32, %c0_i32_0 : i32, i32
  }
  func.func @transform_2(%arg0: i32, %arg1: i32) -> (i32, i32) {
    %c0_i32 = arith.constant 0 : i32
    %c0_i32_0 = arith.constant 0 : i32
    %c0_i32_1 = arith.constant 0 : i32
    return %c0_i32, %c0_i32_0 : i32, i32
  }
  func.func @transform_3(%arg0: i32, %arg1: i32) -> (i32, i32) {
    %c0_i32 = arith.constant 0 : i32
    %c0_i32_0 = arith.constant 0 : i32
    %c0_i32_1 = arith.constant 0 : i32
    return %c0_i32, %c0_i32_0 : i32, i32
  }
  func.func @transform_4(%arg0: i32, %arg1: i32) -> (i32, i32) {
    %c0_i32 = arith.constant 0 : i32
    %c0_i32_0 = arith.constant 0 : i32
    %c0_i32_1 = arith.constant 0 : i32
    return %c0_i32, %c0_i32_0 : i32, i32
  }
  func.func @transform_5(%arg0: i32, %arg1: i32) -> (i32, i32, i32) {
    %c0_i32 = arith.constant 0 : i32
    %c0_i32_0 = arith.constant 0 : i32
    return %arg0, %c0_i32, %arg1 : i32, i32, i32
  }
}

</mosaic_0001>

<llo_original>
// kernel: lseg_optimized_inference.1
$region0: #{lseg_optimized_inference.1}
  #allocation0 [shape = 'u32[]', space=smem, size = 0x4, offset = 0x4, fixed_abs, tag = 'smem constant byte address 0x4 - core index']
  #allocation1 [shape = 'u32[144,128]{1,0:T(1,128)}', space=vmem, size = 0x12000, scoped, tag = 'internal scratch']
  %s0 = inlined_call_operand.vmem [shape: f32[2,3,256], index: 0, kind: input, shape index: {}]
  %s1 = inlined_call_operand.vmem [shape: bf16[32,3], index: 1, kind: input, shape index: {}]
  %s2 = inlined_call_operand.vmem [shape: f32[32,1], index: 2, kind: input, shape index: {}]
  %s3 = inlined_call_operand.vmem [shape: bf16[8,32], index: 3, kind: input, shape index: {}]
  %s4 = inlined_call_operand.vmem [shape: f32[8,1], index: 4, kind: input, shape index: {}]
  %s5 = inlined_call_operand.vmem [shape: bf16[2,8,256], index: 5, kind: output, shape index: {}]
  %s6 = sld [smem:[#allocation0]]
  $region53: #{lseg_optimized_inference.1} parent=0
    _
  %s8 = ssub.s32 1, %s6
  %s9 = scalar_select 0, %s8, %s6
  loop: start=0, step=1, limit=6
  $region2: #{lseg_optimized_inference.1} parent=0 // loop_pre_header
    _
  $region3: #{lseg_optimized_inference.1} parent=0 // loop_header
    %s11 = sphi 0, %s15
    %p12 = scmp.ge.s32.totalorder %s11, 6
    %s18 = sphi 0, %s30
    %s19 = sphi 0, %s26
    %s20 = sphi 0, %s18
    %s21 = sphi 0, %s19
    %s22 = sphi 0, %s20
    %s23 = sphi 0, %s21
    %s35 = sphi 0, %s37
    %s38 = sphi 0, %s35
    %s39 = sphi 0, %s38
    %s55 = sphi 0, %s39
    %s59 = sphi 0, %s59
    %s61 = sphi 0, %s59
    %s62 = sphi 0, %s61
    %s76 = sphi 0, %s62
    %s80 = sphi 0, %s80
    %s82 = sphi 0, %s80
    %s83 = sphi 0, %s82
    %s97 = sphi 0, %s83
    %s101 = sphi 0, %s101
    %s103 = sphi 0, %s101
    %s104 = sphi 0, %s103
    %s118 = sphi 0, %s104
    %s122 = sphi 0, %s122
    %s124 = sphi 0, %s122
    %s125 = sphi 0, %s124
    %s139 = sphi 0, %s125
    %s147 = sphi 0, %s149
    %s150 = sphi 0, %s147
    %s151 = sphi 0, %s150
    %s167 = sphi 0, %s151
  $region4: #{lseg_optimized_inference.1} parent=0 // loop_header_branch
    %14 = sbr.rel (%p12) target = $region8
  $region5: #{lseg_optimized_inference.1} parent=0 // loop_body
    %s16 = ssub.s32 %s11, 1
    %s17 = ssub.s32 %s11, 2
    %s24 = sadd.s32 1, %s19
    %p25 = scmp.ge.s32.totalorder %s24, 2
    %s26 = scalar_select %p25, 0, %s24
    %s27 = sadd.s32 1, %s18
    %s28 = scalar_select %p25, %s27, %s18
    %p29 = scmp.ge.s32.totalorder %s28, 2
    %s30 = scalar_select %p29, 0, %s28
    %s31 = ssub.s32 %s18, %s30
    %s32 = ssub.s32 %s19, %s26
    %s33 = sor.u32 %s31, %s32
    %p34 = scmp.eq.s32.totalorder %s33, 0
    %s36 = sadd.s32 %s35, 1
    %s37 = scalar_select %p34, %s35, %s36
    %p40 = pneg %p34
    %p41 = scmp.eq.s32.totalorder %s11, 3
    %p42 = por %p40, %p41
    %p43 = scmp.ne.s32.totalorder %s35, %s38
    %p44 = scmp.eq.s32.totalorder %s11, 0
    %p45 = por %p43, %p44
    %p46 = scmp.ne.s32.totalorder %s35, %s38
    %p47 = scmp.eq.s32.totalorder %s16, 3
    %p48 = por %p46, %p47
    %p49 = scmp.ne.s32.totalorder %s38, %s39
    %p50 = scmp.eq.s32.totalorder %s16, 0
    %p51 = por %p49, %p50
    %p52 = scmp.ne.s32.totalorder %s38, %s39
    %p53 = scmp.eq.s32.totalorder %s17, 3
    %p54 = por %p52, %p53
    %p56 = scmp.ne.s32.totalorder %s39, %s55
    %p57 = scmp.eq.s32.totalorder %s17, 0
    %p58 = por %p56, %p57
    %s60 = sadd.s32 %s59, 1
    %p63 = scmp.eq.s32.totalorder %s11, 3
    %p64 = scmp.ne.s32.totalorder %s59, %s61
    %p65 = scmp.eq.s32.totalorder %s11, 0
    %p66 = por %p64, %p65
    %p67 = scmp.ne.s32.totalorder %s59, %s61
    %p68 = scmp.eq.s32.totalorder %s16, 3
    %p69 = por %p67, %p68
    %p70 = scmp.ne.s32.totalorder %s61, %s62
    %p71 = scmp.eq.s32.totalorder %s16, 0
    %p72 = por %p70, %p71
    %p73 = scmp.ne.s32.totalorder %s61, %s62
    %p74 = scmp.eq.s32.totalorder %s17, 3
    %p75 = por %p73, %p74
    %p77 = scmp.ne.s32.totalorder %s62, %s76
    %p78 = scmp.eq.s32.totalorder %s17, 0
    %p79 = por %p77, %p78
    %s81 = sadd.s32 %s80, 1
    %p84 = scmp.eq.s32.totalorder %s11, 3
    %p85 = scmp.ne.s32.totalorder %s80, %s82
    %p86 = scmp.eq.s32.totalorder %s11, 0
    %p87 = por %p85, %p86
    %p88 = scmp.ne.s32.totalorder %s80, %s82
    %p89 = scmp.eq.s32.totalorder %s16, 3
    %p90 = por %p88, %p89
    %p91 = scmp.ne.s32.totalorder %s82, %s83
    %p92 = scmp.eq.s32.totalorder %s16, 0
    %p93 = por %p91, %p92
    %p94 = scmp.ne.s32.totalorder %s82, %s83
    %p95 = scmp.eq.s32.totalorder %s17, 3
    %p96 = por %p94, %p95
    %p98 = scmp.ne.s32.totalorder %s83, %s97
    %p99 = scmp.eq.s32.totalorder %s17, 0
    %p100 = por %p98, %p99
    %s102 = sadd.s32 %s101, 1
    %p105 = scmp.eq.s32.totalorder %s11, 3
    %p106 = scmp.ne.s32.totalorder %s101, %s103
    %p107 = scmp.eq.s32.totalorder %s11, 0
    %p108 = por %p106, %p107
    %p109 = scmp.ne.s32.totalorder %s101, %s103
    %p110 = scmp.eq.s32.totalorder %s16, 3
    %p111 = por %p109, %p110
    %p112 = scmp.ne.s32.totalorder %s103, %s104
    %p113 = scmp.eq.s32.totalorder %s16, 0
    %p114 = por %p112, %p113
    %p115 = scmp.ne.s32.totalorder %s103, %s104
    %p116 = scmp.eq.s32.totalorder %s17, 3
    %p117 = por %p115, %p116
    %p119 = scmp.ne.s32.totalorder %s104, %s118
    %p120 = scmp.eq.s32.totalorder %s17, 0
    %p121 = por %p119, %p120
    %s123 = sadd.s32 %s122, 1
    %p126 = scmp.eq.s32.totalorder %s11, 3
    %p127 = scmp.ne.s32.totalorder %s122, %s124
    %p128 = scmp.eq.s32.totalorder %s11, 0
    %p129 = por %p127, %p128
    %p130 = scmp.ne.s32.totalorder %s122, %s124
    %p131 = scmp.eq.s32.totalorder %s16, 3
    %p132 = por %p130, %p131
    %p133 = scmp.ne.s32.totalorder %s124, %s125
    %p134 = scmp.eq.s32.totalorder %s16, 0
    %p135 = por %p133, %p134
    %p136 = scmp.ne.s32.totalorder %s124, %s125
    %p137 = scmp.eq.s32.totalorder %s17, 3
    %p138 = por %p136, %p137
    %p140 = scmp.ne.s32.totalorder %s125, %s139
    %p141 = scmp.eq.s32.totalorder %s17, 0
    %p142 = por %p140, %p141
    %s143 = ssub.s32 %s18, %s30
    %s144 = ssub.s32 %s19, %s26
    %s145 = sor.u32 %s143, %s144
    %p146 = scmp.eq.s32.totalorder %s145, 0
    %s148 = sadd.s32 %s147, 1
    %s149 = scalar_select %p146, %s147, %s148
    %p152 = pneg %p146
    %p153 = scmp.eq.s32.totalorder %s11, 3
    %p154 = por %p152, %p153
    %p155 = scmp.ne.s32.totalorder %s147, %s150
    %p156 = scmp.eq.s32.totalorder %s11, 0
    %p157 = por %p155, %p156
    %p158 = scmp.ne.s32.totalorder %s147, %s150
    %p159 = scmp.eq.s32.totalorder %s16, 3
    %p160 = por %p158, %p159
    %p161 = scmp.ne.s32.totalorder %s150, %s151
    %p162 = scmp.eq.s32.totalorder %s16, 0
    %p163 = por %p161, %p162
    %p164 = scmp.ne.s32.totalorder %s150, %s151
    %p165 = scmp.eq.s32.totalorder %s17, 3
    %p166 = por %p164, %p165
    %p168 = scmp.ne.s32.totalorder %s151, %s167
    %p169 = scmp.eq.s32.totalorder %s17, 0
    %p170 = por %p168, %p169
    %p171 = scmp.le.s32.totalorder 1, %s11
    %p172 = scmp.lt.s32.totalorder %s11, 5
    %p173 = pnand %p171, %p172
    %p174 = pneg %p173
    // Predicated region
    $region9: #{lseg_optimized_inference.1} parent=5 // pred_check
      _
    $region10: #{lseg_optimized_inference.1} parent=5 // pred_check_branch
      %176 = sbr.rel (%p173) target = $region12
    $region11: #{lseg_optimized_inference.1} parent=5 // pred_region
      %s177 = ssub.s32 %s11, 1
      // Predicated region
      $region13: #{lseg_optimized_inference.1} parent=11 // pred_check
        %p178 = pneg %p72
      $region14: #{lseg_optimized_inference.1} parent=11 // pred_check_branch
        %180 = sbr.rel (%p178) target = $region16
      $region15: #{lseg_optimized_inference.1} parent=11 // pred_region
        _
      $region16: #{lseg_optimized_inference.1} parent=11 // pred_fallthru
        _
      // Predicated region
      $region17: #{lseg_optimized_inference.1} parent=11 // pred_check
        %p181 = pneg %p93
      $region18: #{lseg_optimized_inference.1} parent=11 // pred_check_branch
        %183 = sbr.rel (%p181) target = $region20
      $region19: #{lseg_optimized_inference.1} parent=11 // pred_region
        _
      $region20: #{lseg_optimized_inference.1} parent=11 // pred_fallthru
        _
      // Predicated region
      $region21: #{lseg_optimized_inference.1} parent=11 // pred_check
        %p184 = pneg %p114
      $region22: #{lseg_optimized_inference.1} parent=11 // pred_check_branch
        %186 = sbr.rel (%p184) target = $region24
      $region23: #{lseg_optimized_inference.1} parent=11 // pred_region
        _
      $region24: #{lseg_optimized_inference.1} parent=11 // pred_fallthru
        _
      // Predicated region
      $region25: #{lseg_optimized_inference.1} parent=11 // pred_check
        %p187 = pneg %p135
      $region26: #{lseg_optimized_inference.1} parent=11 // pred_check_branch
        %189 = sbr.rel (%p187) target = $region28
      $region27: #{lseg_optimized_inference.1} parent=11 // pred_region
        _
      $region28: #{lseg_optimized_inference.1} parent=11 // pred_fallthru
        _
    $region12: #{lseg_optimized_inference.1} parent=5 // pred_fallthru
      _
    %p190 = scmp.lt.s32.totalorder %s11, 4
    // Predicated region
    $region29: #{lseg_optimized_inference.1} parent=5 // pred_check
      %p191 = pneg %p190
    $region30: #{lseg_optimized_inference.1} parent=5 // pred_check_branch
      %193 = sbr.rel (%p191) target = $region32
    $region31: #{lseg_optimized_inference.1} parent=5 // pred_region
      // Predicated region
      $region33: #{lseg_optimized_inference.1} parent=31 // pred_check
        %p194 = pneg %p45
      $region34: #{lseg_optimized_inference.1} parent=31 // pred_check_branch
        %196 = sbr.rel (%p194) target = $region36
      $region35: #{lseg_optimized_inference.1} parent=31 // pred_region
        %p197 = scmp.lt.s32.totalorder %s18, 1
        %s198 = scalar_select %p197, %s18, 1
        %p199 = scmp.lt.s32.totalorder %s19, 1
        %s200 = scalar_select %p199, %s19, 1
        %s201 = smul.addr %s198, 2
        %s202 = sadd.s32 %s200, %s201
        %s203 = smul.addr %s202, 4
        %s204 = scalar_lea.vmem %s0, %s203
      $region36: #{lseg_optimized_inference.1} parent=31 // pred_fallthru
        _
    $region32: #{lseg_optimized_inference.1} parent=5 // pred_fallthru
      _
    %p205 = scmp.le.s32.totalorder 1, %s11
    %p206 = scmp.lt.s32.totalorder %s11, 5
    %p207 = pnand %p205, %p206
    %p208 = pneg %p207
    // Predicated region
    $region37: #{lseg_optimized_inference.1} parent=5 // pred_check
      _
    $region38: #{lseg_optimized_inference.1} parent=5 // pred_check_branch
      %210 = sbr.rel (%p207) target = $region40
    $region39: #{lseg_optimized_inference.1} parent=5 // pred_region
      %s211 = ssub.s32 %s11, 1
      %p212 = scmp.lt.s32.totalorder %s20, 1
      %s213 = scalar_select %p212, %s20, 1
      %p214 = scmp.lt.s32.totalorder %s21, 1
      %s215 = scalar_select %p214, %s21, 1
      %s216 = smul.addr %s213, 2
      %s217 = sadd.s32 %s215, %s216
      %s218 = smul.addr %s217, 4
      %s219 = scalar_lea.vmem %s0, %s218
      %p220 = pneg %p51
      %p221 = pneg %p48
      %p222 = pneg %p72
      %p223 = pneg %p69
      %p224 = pneg %p93
      %p225 = pneg %p90
      %p226 = pneg %p114
      %p227 = pneg %p111
      %p228 = pneg %p135
      %p229 = pneg %p132
      %p230 = pneg %p163
      %p231 = pneg %p160
      %p232 = scmp.lt.s32.totalorder %s20, 1
      %s233 = scalar_select %p232, %s20, 1
      %p234 = scmp.lt.s32.totalorder %s21, 1
      %s235 = scalar_select %p234, %s21, 1
      %s236 = smul.addr %s233, 2
      %s237 = sadd.s32 %s235, %s236
      %s238 = smul.addr %s237, 4
      %s239 = scalar_lea.vmem %s5, %s238
      %p240 = scmp.lt.s32.totalorder %s20, 1
      %s241 = scalar_select %p240, %s20, 1
      %p242 = scmp.lt.s32.totalorder %s21, 1
      %s243 = scalar_select %p242, %s21, 1
      %s244 = smul.addr %s241, 2
      %s245 = sadd.s32 %s243, %s244
      %s246 = smul.addr %s245, 4
      %s247 = scalar_lea.vmem %s0, %s246
      %p248 = scmp.lt.s32.totalorder %s20, 1
      %s249 = scalar_select %p248, %s20, 1
      %p250 = scmp.lt.s32.totalorder %s21, 1
      %s251 = scalar_select %p250, %s21, 1
      %s252 = smul.addr %s249, 2
      %s253 = sadd.s32 %s251, %s252
      %s254 = smul.addr %s253, 4
      %s255 = scalar_lea.vmem %s5, %s254
      %v257 = vld [vmem:[%s247] sm:$0x7]
      %v258 = vpack.c.bf16 %v257, %v257
      %v259 = vld [vmem:[%s1] sm:$0xf]
      %v260 = vld [vmem:[%s1 + $0x4] sm:$0xf]
      %v261 = vld [vmem:[%s1 + $0x8] sm:$0xf]
      %v262 = vld [vmem:[%s1 + $0xc] sm:$0xf]
      %v263 = vld [vmem:[%s2] sm:$0xff]
      %v264 = vld [vmem:[%s2 + $0x8] sm:$0xff]
      %v265 = vld [vmem:[%s2 + $0x10] sm:$0xff]
      %v266 = vld [vmem:[%s2 + $0x18] sm:$0xff]
      %268 = vset.pattern.permute.xlu0 0
      %269 = vperm.xlu0 %268, %v263
      %v270 = vpop.permute.xlu0 %269
      %273 = vset.pattern.permute.xlu0 0
      %274 = vperm.xlu0 %273, %v264
      %v275 = vpop.permute.xlu0 %274
      %278 = vset.pattern.permute.xlu0 0
      %279 = vperm.xlu0 %278, %v265
      %v280 = vpop.permute.xlu0 %279
      %283 = vset.pattern.permute.xlu0 0
      %284 = vperm.xlu0 %283, %v266
      %v285 = vpop.permute.xlu0 %284
      %v291 = vunpack.c.l.b16 %v259
      %v292 = vunpack.c.l.b16 %v260
      %v293 = vunpack.c.l.b16 %v261
      %v294 = vunpack.c.l.b16 %v262
      %v295 = vpack.c.b16 %v292, %v291
      %v296 = vpack.c.b16 %v294, %v293
      %vm297 = vcmask 23552
      %v299 = vsel %vm297, %v295, 0
      %v302 = vsel %vm297, %v296, 0
      %vm304 = vcmask 1040384
      %vm305 = vcmask 1041408
      %v306 = vsel %vm304, 4294967295, 65535
      %v307 = vsel %vm305, %v306, 0
      %v309 = vand.u32 %v258, %v307
      %311 = vmatprep.subr.bf16.mxu0 0
      %312 = vmatpush1.bf16.msra.mxu0 %v309
      %313 = vmatprep.subr.bf16.mxu0 0
      %314 = vmatpush1.bf16.msra.mxu0 0
      %315 = vmatprep.subr.bf16.mxu0 0
      %316 = vmatpush1.bf16.msra.mxu0 0
      %317 = vmatprep.subr.bf16.mxu0 0
      %318 = vmatpush1.bf16.msra.mxu0 0
      %319 = vmatprep.subr.bf16.mxu0 0
      %320 = vmatpush1.bf16.msra.mxu0 0
      %321 = vmatprep.subr.bf16.mxu0 0
      %322 = vmatpush1.bf16.msra.mxu0 0
      %323 = vmatprep.subr.bf16.mxu0 0
      %324 = vmatpush1.bf16.msra.mxu0 0
      %325 = vmatprep.subr.bf16.mxu0 0
      %326 = vmatpush1.bf16.msra.mxu0 0
      %327 = vmatprep.subr.bf16.mxu0 0
      %328 = vmatpush1.bf16.msra.mxu0 0
      %329 = vmatprep.subr.bf16.mxu0 0
      %330 = vmatpush1.bf16.msra.mxu0 0
      %331 = vmatprep.subr.bf16.mxu0 0
      %332 = vmatpush1.bf16.msra.mxu0 0
      %333 = vmatprep.subr.bf16.mxu0 0
      %334 = vmatpush1.bf16.msra.mxu0 0
      %335 = vmatprep.subr.bf16.mxu0 0
      %336 = vmatpush1.bf16.msra.mxu0 0
      %337 = vmatprep.subr.bf16.mxu0 0
      %338 = vmatpush1.bf16.msra.mxu0 0
      %339 = vmatprep.subr.bf16.mxu0 0
      %340 = vmatpush1.bf16.msra.mxu0 0
      %341 = vmatprep.subr.bf16.mxu0 0
      %342 = vmatpush1.bf16.msra.mxu0 0
      %343 = vmatprep.mubr.bf16.mxu0 0
      %344 = vmatmul.mubr.bf16.gmra.mrb[0].mxu0 %v299
      %v345 = vpop.f32.mrb[0].mxu0
      %v346 = vadd.f32 %v270, %v345
      %v347 = vpop.f32.mrb[0].mxu0
      %v348 = vpop.f32.mrb[0].mxu0
      %v349 = vadd.f32 %v275, %v348
      %v350 = vpop.f32.mrb[0].mxu0
      %351 = vmatprep.mubr.bf16.mxu0 0
      %352 = vmatmul.mubr.bf16.gmra.mrb[0].mxu0 %v302
      %v353 = vpop.f32.mrb[0].mxu0
      %v354 = vadd.f32 %v280, %v353
      %v355 = vpop.f32.mrb[0].mxu0
      %v356 = vpop.f32.mrb[0].mxu0
      %v357 = vadd.f32 %v285, %v356
      %v358 = vpop.f32.mrb[0].mxu0
      %359 = vdwg.mxu0
      %v360 = vmax.f32 %v346, 0.0
      %v361 = vmax.f32 %v349, 0.0
      %v362 = vmax.f32 %v354, 0.0
      %v363 = vmax.f32 %v357, 0.0
      %v364 = vpack.c.bf16 %v361, %v360
      %v365 = vpack.c.bf16 %v363, %v362
      %v366 = vld [vmem:[%s3] sm:$0xf]
      %v367 = vld [vmem:[%s4] sm:$0xff]
      %369 = vset.pattern.permute.xlu0 0
      %370 = vperm.xlu0 %369, %v367
      %v371 = vpop.permute.xlu0 %370
      %vm373 = vcmask 261120
      %v375 = vsel %vm373, %v366, 0
      %377 = vmatprep.subr.bf16.mxu0 0
      %378 = vmatpush1.bf16.msra.mxu0 %v364
      %379 = vmatprep.subr.bf16.mxu0 0
      %380 = vmatpush1.bf16.msra.mxu0 %v365
      %381 = vmatprep.subr.bf16.mxu0 0
      %382 = vmatpush1.bf16.msra.mxu0 0
      %383 = vmatprep.subr.bf16.mxu0 0
      %384 = vmatpush1.bf16.msra.mxu0 0
      %385 = vmatprep.subr.bf16.mxu0 0
      %386 = vmatpush1.bf16.msra.mxu0 0
      %387 = vmatprep.subr.bf16.mxu0 0
      %388 = vmatpush1.bf16.msra.mxu0 0
      %389 = vmatprep.subr.bf16.mxu0 0
      %390 = vmatpush1.bf16.msra.mxu0 0
      %391 = vmatprep.subr.bf16.mxu0 0
      %392 = vmatpush1.bf16.msra.mxu0 0
      %393 = vmatprep.subr.bf16.mxu0 0
      %394 = vmatpush1.bf16.msra.mxu0 0
      %395 = vmatprep.subr.bf16.mxu0 0
      %396 = vmatpush1.bf16.msra.mxu0 0
      %397 = vmatprep.subr.bf16.mxu0 0
      %398 = vmatpush1.bf16.msra.mxu0 0
      %399 = vmatprep.subr.bf16.mxu0 0
      %400 = vmatpush1.bf16.msra.mxu0 0
      %401 = vmatprep.subr.bf16.mxu0 0
      %402 = vmatpush1.bf16.msra.mxu0 0
      %403 = vmatprep.subr.bf16.mxu0 0
      %404 = vmatpush1.bf16.msra.mxu0 0
      %405 = vmatprep.subr.bf16.mxu0 0
      %406 = vmatpush1.bf16.msra.mxu0 0
      %407 = vmatprep.subr.bf16.mxu0 0
      %408 = vmatpush1.bf16.msra.mxu0 0
      %409 = vmatprep.mubr.bf16.mxu0 0
      %410 = vmatmul.mubr.bf16.gmra.mrb[0].mxu0 %v375
      %v411 = vpop.f32.mrb[0].mxu0
      %v412 = vadd.f32 %v371, %v411
      %v413 = vpop.f32.mrb[0].mxu0
      %v414 = vpop.f32.mrb[0].mxu0
      %v415 = vpop.f32.mrb[0].mxu0
      %416 = vdwg.mxu0
      %v417 = vpack.c.bf16 %v412, %v412
      %418 = vst [vmem:[%s255] sm:$0xf] %v417
      %p419 = scmp.lt.s32.totalorder %s20, 1
      %s420 = scalar_select %p419, %s20, 1
      %p421 = scmp.lt.s32.totalorder %s21, 1
      %s422 = scalar_select %p421, %s21, 1
      %s423 = smul.addr %s420, 2
      %s424 = sadd.s32 %s422, %s423
      %s425 = smul.addr %s424, 4
      %s426 = scalar_lea.vmem %s5, %s425
      // Predicated region
      $region41: #{lseg_optimized_inference.1} parent=39 // pred_check
        %p427 = pneg %p160
      $region42: #{lseg_optimized_inference.1} parent=39 // pred_check_branch
        %429 = sbr.rel (%p427) target = $region44
      $region43: #{lseg_optimized_inference.1} parent=39 // pred_region
        _
      $region44: #{lseg_optimized_inference.1} parent=39 // pred_fallthru
        _
    $region40: #{lseg_optimized_inference.1} parent=5 // pred_fallthru
      _
    %p430 = scmp.le.s32.totalorder 2, %s11
    // Predicated region
    $region45: #{lseg_optimized_inference.1} parent=5 // pred_check
      %p431 = pneg %p430
    $region46: #{lseg_optimized_inference.1} parent=5 // pred_check_branch
      %433 = sbr.rel (%p431) target = $region48
    $region47: #{lseg_optimized_inference.1} parent=5 // pred_region
      %s434 = ssub.s32 %s11, 2
      // Predicated region
      $region49: #{lseg_optimized_inference.1} parent=47 // pred_check
        %p435 = pneg %p166
      $region50: #{lseg_optimized_inference.1} parent=47 // pred_check_branch
        %437 = sbr.rel (%p435) target = $region52
      $region51: #{lseg_optimized_inference.1} parent=47 // pred_region
        %p438 = scmp.lt.s32.totalorder %s22, 1
        %s439 = scalar_select %p438, %s22, 1
        %p440 = scmp.lt.s32.totalorder %s23, 1
        %s441 = scalar_select %p440, %s23, 1
        %s442 = smul.addr %s439, 2
        %s443 = sadd.s32 %s441, %s442
        %s444 = smul.addr %s443, 4
        %s445 = scalar_lea.vmem %s5, %s444
      $region52: #{lseg_optimized_inference.1} parent=47 // pred_fallthru
        _
    $region48: #{lseg_optimized_inference.1} parent=5 // pred_fallthru
      _
  $region6: #{lseg_optimized_inference.1} parent=0 // loop_footer
    %s15 = sadd.s32 1, %s11
  $region7: #{lseg_optimized_inference.1} parent=0 // loop_footer_branch
    %10 = sbr.rel target = $region3
  $region8: #{lseg_optimized_inference.1} parent=0 // loop_exit
    _

</llo_original>
